<compile_context>
chip_gen: v7x
topology: tpu7x:2x2x1
jax: 0.10.0
libtpu: 0.0.40
codegen_flags: <defaults>
</compile_context>

<pallas_src>
import jax
import jax.numpy as jnp
from jax.experimental import pallas as pl
from jax.experimental.pallas import tpu as pltpu


_VMEM_TARGET = 16 * 1024 * 1024   # target bytes of live (double-buffered) blocks
_VMEM_LIMIT = 32 * 1024 * 1024    # scoped VMEM limit passed to the compiler
_MAX_LANE_TILE = 2048             # preferred max lane (H*W) tile width


def _pick_tile(total, align, preferred):
    """Largest t <= preferred with t % align == 0 and total % t == 0, else full."""
    if total <= preferred:
        return total
    t = (preferred // align) * align
    while t >= align:
        if total % t == 0:
            return t
        t -= align
    return total


# ---------------------------------------------------------------------------
# Kernels (one grid step reads a tile from all L inputs)
# ---------------------------------------------------------------------------
def _make_add_kernel(num_inputs):
    def kernel(*refs):
        x_refs, o_ref = refs[:num_inputs], refs[num_inputs]
        acc = x_refs[0][...]
        for r in x_refs[1:]:
            acc = acc + r[...]
        o_ref[...] = acc
    return kernel


def _make_cat_kernel(channel_offsets, channel_sizes):
    n = len(channel_sizes)

    def kernel(*refs):
        x_refs, o_ref = refs[:n], refs[n]
        for r, off, c in zip(x_refs, channel_offsets, channel_sizes):
            o_ref[:, off:off + c, :] = r[...]
    return kernel


# ---------------------------------------------------------------------------
# Wrapper (MergeBlock equivalent)
# ---------------------------------------------------------------------------
def merge_block(xs, policy):
    """xs: list/tuple of NCHW arrays. 'add' requires identical shapes;
    'cat' allows differing channel counts (same N, H, W)."""
    if policy not in ("add", "cat"):
        raise ValueError(
            "`merge_policy` must be one of: ['add', 'cat'], got {}".format(policy)
        )

    xs = list(xs)
    L = len(xs)
    if L == 1:
        return xs[0]  # both policies are the identity for a single input

    N, _, H, W = xs[0].shape
    Cs = [int(x.shape[1]) for x in xs]
    dtype = xs[0].dtype
    HW = H * W
    itemsize = jnp.dtype(dtype).itemsize

    if policy == "add":
        for x in xs:
            assert x.shape == xs[0].shape, "'add' requires identical shapes"
        C = Cs[0]
        NC = N * C
        slab_bytes = NC * HW * itemsize

        # Free contiguous reshape: (N, C, H, W) -> (N*C, H*W).  H*W on lanes,
        # N*C on sublanes -> maximal tiling freedom and lane-dense stores.
        xs_2d = [x.reshape(NC, HW) for x in xs]

        thw = _pick_tile(HW, 128, _MAX_LANE_TILE)
        live = 2 * (L + 1)  # double-buffered L input blocks + 1 output block
        if NC % 8 == 0:
            per_row = max(1, thw * itemsize * live)
            max_tr = max(8, (_VMEM_TARGET // per_row) // 8 * 8)
            tr = _pick_tile(NC, 8, min(max_tr, NC))
        else:
            tr = NC  # (8,128) rule: sublane block dim must be %8 or full extent
        grid = (NC // tr, HW // thw)

        in_specs = [pl.BlockSpec((tr, thw), lambda ri, hi: (ri, hi))
                    for _ in range(L)]
        out_spec = pl.BlockSpec((tr, thw), lambda ri, hi: (ri, hi))
        out_shape = jax.ShapeDtypeStruct((NC, HW), dtype)
        kernel = _make_add_kernel(L)
        dim_sem = ("parallel", "parallel")
        cost = pl.CostEstimate(flops=(L - 1) * NC * HW,
                               transcendentals=0,
                               bytes_accessed=(L + 1) * slab_bytes)
        call_args = xs_2d
        final_shape = (N, C, H, W)
    else:  # 'cat'
        for x in xs:
            assert (x.shape[0], x.shape[2], x.shape[3]) == (N, H, W), \
                "'cat' requires matching N, H, W"
        C_total = sum(Cs)
        offsets = []
        off = 0
        for c in Cs:
            offsets.append(off)
            off += c
        slab_bytes = N * C_total * HW * itemsize

        # Free reshape: collapse H, W onto the lane axis.
        xs_3d = [x.reshape(x.shape[0], x.shape[1], HW) for x in xs]

        # Double-buffered input blocks (sum C_j channels) + output block (C_total).
        live = 4
        per_lane = max(1, N * C_total * itemsize * live)
        max_thw = max(128, (_VMEM_TARGET // per_lane) // 128 * 128)
        thw = _pick_tile(HW, 128, min(max_thw, _MAX_LANE_TILE))
        grid = (HW // thw,)

        in_specs = [pl.BlockSpec((N, c, thw), lambda hi: (0, 0, hi)) for c in Cs]
        out_spec = pl.BlockSpec((N, C_total, thw), lambda hi: (0, 0, hi))
        out_shape = jax.ShapeDtypeStruct((N, C_total, HW), dtype)
        kernel = _make_cat_kernel(offsets, Cs)
        dim_sem = ("parallel",)
        cost = pl.CostEstimate(flops=0, transcendentals=0,
                               bytes_accessed=2 * slab_bytes)
        call_args = xs_3d
        final_shape = (N, C_total, H, W)

    out = pl.pallas_call(
        kernel,
        out_shape=out_shape,
        grid_spec=pltpu.PrefetchScalarGridSpec(
            num_scalar_prefetch=0,
            grid=grid,
            in_specs=in_specs,
            out_specs=out_spec,
        ),
        compiler_params=pltpu.CompilerParams(
            dimension_semantics=dim_sem,
            vmem_limit_bytes=_VMEM_LIMIT,
        ),
        cost_estimate=cost,
    )(*call_args)

    return out.reshape(final_shape)


# ---------------------------------------------------------------------------
# Demo / self-check
# ---------------------------------------------------------------------------
if __name__ == "__main__":
    key = jax.random.PRNGKey(0)

    # --- main demo: L=3 maps of (2, 4, 16, 16) ---
    N, C, H, W = 2, 4, 16, 16
    L = 3
    keys = jax.random.split(key, L)
    xs = [jax.random.normal(k, (N, C, H, W), dtype=jnp.float32) for k in keys]

    out_add = jax.block_until_ready(merge_block(xs, "add"))
    ref_add = xs[0] + xs[1] + xs[2]
    assert out_add.shape == (N, C, H, W)
    assert jnp.allclose(out_add, ref_add, atol=1e-6), "add mismatch"

    out_cat = jax.block_until_ready(merge_block(xs, "cat"))
    ref_cat = jnp.concatenate(xs, axis=1)
    assert out_cat.shape == (N, L * C, H, W)
    assert jnp.array_equal(out_cat, ref_cat), "cat mismatch"

    # --- aligned case: lane dim multiple of 128, mixed channel counts for cat ---
    k1, k2 = jax.random.split(keys[0])
    a = jax.random.normal(k1, (1, 8, 8, 48), dtype=jnp.float32)   # HW = 384 = 3*128
    b = jax.random.normal(k2, (1, 8, 8, 48), dtype=jnp.float32)
    out_add2 = jax.block_until_ready(merge_block([a, b], "add"))
    assert jnp.allclose(out_add2, a + b, atol=1e-6), "add2 mismatch"

    c = jax.random.normal(k2, (1, 16, 8, 48), dtype=jnp.float32)  # different C
    out_cat2 = jax.block_until_ready(merge_block([a, c], "cat"))
    assert jnp.array_equal(out_cat2, jnp.concatenate([a, c], axis=1)), "cat2 mismatch"

    # --- unaligned case: 7x7 maps, odd channel counts (full-extent blocks) ---
    k3, k4 = jax.random.split(k1)
    p = jax.random.normal(k3, (2, 3, 7, 7), dtype=jnp.float32)
    q = jax.random.normal(k4, (2, 3, 7, 7), dtype=jnp.float32)
    out_add3 = jax.block_until_ready(merge_block([p, q], "add"))
    assert jnp.allclose(out_add3, p + q, atol=1e-6), "add3 mismatch"

    r = jax.random.normal(k3, (1, 5, 7, 7), dtype=jnp.float32)
    s = jax.random.normal(k4, (1, 3, 7, 7), dtype=jnp.float32)
    out_cat3 = jax.block_until_ready(merge_block([r, s], "cat"))
    assert jnp.array_equal(out_cat3, jnp.concatenate([r, s], axis=1)), "cat3 mismatch"

    print("KERNEL_OK")
</pallas_src>

<mosaic_0001>
module attributes {stable_mosaic.version = 11 : i64} {
  func.func @kernel(%arg0: i32, %arg1: i32, %arg2: memref<8x256xf32, #tpu.memory_space<vmem>>, %arg3: memref<8x256xf32, #tpu.memory_space<vmem>>, %arg4: memref<8x256xf32, #tpu.memory_space<vmem>>, %arg5: memref<8x256xf32, #tpu.memory_space<vmem>>) attributes {dimension_semantics = [#tpu.dimension_semantics<parallel>, #tpu.dimension_semantics<parallel>], iteration_bounds = array<i64: 1, 1>, scalar_prefetch = 0 : i64, scratch_operands = 0 : i64, tpu.core_type = #tpu.core_type<tc>, window_params = [{transform_indices = @transform_0, window_bounds = array<i64: 8, 256>}, {transform_indices = @transform_1, window_bounds = array<i64: 8, 256>}, {transform_indices = @transform_2, window_bounds = array<i64: 8, 256>}, {transform_indices = @transform_3, window_bounds = array<i64: 8, 256>}]} {
    %c0 = arith.constant 0 : index
    %c0_0 = arith.constant 0 : index
    %0 = vector.load %arg2[%c0, %c0_0] : memref<8x256xf32, #tpu.memory_space<vmem>>, vector<8x256xf32>
    %c0_1 = arith.constant 0 : index
    %c0_2 = arith.constant 0 : index
    %1 = vector.load %arg3[%c0_1, %c0_2] : memref<8x256xf32, #tpu.memory_space<vmem>>, vector<8x256xf32>
    %2 = arith.addf %0, %1 : vector<8x256xf32>
    %c0_3 = arith.constant 0 : index
    %c0_4 = arith.constant 0 : index
    %3 = vector.load %arg4[%c0_3, %c0_4] : memref<8x256xf32, #tpu.memory_space<vmem>>, vector<8x256xf32>
    %4 = arith.addf %2, %3 : vector<8x256xf32>
    %c0_5 = arith.constant 0 : index
    %c0_6 = arith.constant 0 : index
    %5 = vector.load %arg5[%c0_5, %c0_6] : memref<8x256xf32, #tpu.memory_space<vmem>>, vector<8x256xf32>
    tpu.vector_store %arg5[%c0_5, %c0_6], %4 {strides = array<i32>} : memref<8x256xf32, #tpu.memory_space<vmem>>, vector<8x256xf32>,
    return
  }
  func.func @transform_0(%arg0: i32, %arg1: i32) -> (i32, i32) {
    %c0_i32 = arith.constant 0 : i32
    return %arg0, %arg1 : i32, i32
  }
  func.func @transform_1(%arg0: i32, %arg1: i32) -> (i32, i32) {
    %c0_i32 = arith.constant 0 : i32
    return %arg0, %arg1 : i32, i32
  }
  func.func @transform_2(%arg0: i32, %arg1: i32) -> (i32, i32) {
    %c0_i32 = arith.constant 0 : i32
    return %arg0, %arg1 : i32, i32
  }
  func.func @transform_3(%arg0: i32, %arg1: i32) -> (i32, i32) {
    %c0_i32 = arith.constant 0 : i32
    return %arg0, %arg1 : i32, i32
  }
}

</mosaic_0001>

<llo_original>
// kernel: tpu_custom_call.1
$region0: #{tpu_custom_call.1}
  #allocation0 [shape = 'u32[]', space=smem, size = 0x4, offset = 0x4, fixed_abs, tag = 'smem constant byte address 0x4 - core index']
  #allocation1 [shape = 'u32[144,128]{1,0:T(1,128)}', space=vmem, size = 0x12000, scoped, tag = 'internal scratch']
  %s0 = inlined_call_operand.hbm [shape: f32[8,256], index: 0, kind: input, shape index: {}]
  %s1 = inlined_call_operand.hbm [shape: f32[8,256], index: 1, kind: input, shape index: {}]
  %s2 = inlined_call_operand.hbm [shape: f32[8,256], index: 2, kind: input, shape index: {}]
  %s3 = inlined_call_operand.hbm [shape: f32[8,256], index: 3, kind: output, shape index: {}]
  %s4 = sld [smem:[#allocation0]]
  $region34: #{tpu_custom_call.1} parent=0
    _
  %s6 = ssub.s32 1, %s4
  %s7 = scalar_select 0, %s6, %s4
  $region1: #{tpu_custom_call.1} parent=0
    #allocation2 [shape = 'u8[8192]{0}', space=vmem, size = 0x2000, scoped, tag = 'input window, operand 0, single buffered']
    #allocation3 [shape = 's32[1]{0}', space=sflag, size = 0x4, scoped, tag = 'scoped memory for tpu_custom_call.1']
    #allocation4 [shape = 's32[1]{0}', space=sflag, size = 0x4, scoped, tag = 'scoped memory for tpu_custom_call.1']
    #allocation5 [shape = 'u8[8192]{0}', space=vmem, size = 0x2000, scoped, tag = 'input window, operand 1, single buffered']
    #allocation6 [shape = 's32[1]{0}', space=sflag, size = 0x4, scoped, tag = 'scoped memory for tpu_custom_call.1']
    #allocation7 [shape = 'u8[8192]{0}', space=vmem, size = 0x2000, scoped, tag = 'input window, operand 2, single buffered']
    #allocation8 [shape = 'u8[8192]{0}', space=vmem, size = 0x2000, scoped, tag = 'output window, operand 0, single buffered']
    %8 = vsyncpa [#allocation3], 0
    %9 = vsyncpa [#allocation6], 0
    %10 = vsyncpa [#allocation4], 0
    // Predicated region
    $region2: #{tpu_custom_call.1} parent=1 // pred_check
      _
    $region3: #{tpu_custom_call.1} parent=1 // pred_check_branch
      %12 = sbr.rel (0) target = $region5
    $region4: #{tpu_custom_call.1} parent=1 // pred_region
      %s14 = ssub.s32 256, 256
      %15 = vsyncadd [#allocation3], %s14
      %s17 = sshll.u32 [#allocation2], 4
      %s18 = int_to_ptr.vmem [resolvable:$true] %s17
      %20 = dma.hbm_to_vmem [thread:$0]  %s0, 256, %s18, [#allocation3]
    $region5: #{tpu_custom_call.1} parent=1 // pred_fallthru
      _
    // Predicated region
    $region6: #{tpu_custom_call.1} parent=1 // pred_check
      _
    $region7: #{tpu_custom_call.1} parent=1 // pred_check_branch
      %22 = sbr.rel (0) target = $region9
    $region8: #{tpu_custom_call.1} parent=1 // pred_region
      %s24 = ssub.s32 256, 256
      %25 = vsyncadd [#allocation6], %s24
      %s27 = sshll.u32 [#allocation5], 4
      %s28 = int_to_ptr.vmem [resolvable:$true] %s27
      %30 = dma.hbm_to_vmem [thread:$0]  %s1, 256, %s28, [#allocation6]
    $region9: #{tpu_custom_call.1} parent=1 // pred_fallthru
      _
    // Predicated region
    $region10: #{tpu_custom_call.1} parent=1 // pred_check
      _
    $region11: #{tpu_custom_call.1} parent=1 // pred_check_branch
      %32 = sbr.rel (0) target = $region13
    $region12: #{tpu_custom_call.1} parent=1 // pred_region
      %s34 = ssub.s32 256, 256
      %35 = vsyncadd [#allocation6], %s34
      %s37 = sshll.u32 [#allocation7], 4
      %s38 = int_to_ptr.vmem [resolvable:$true] %s37
      %40 = dma.hbm_to_vmem [thread:$0]  %s2, 256, %s38, [#allocation6]
    $region13: #{tpu_custom_call.1} parent=1 // pred_fallthru
      _
    // Predicated region
    $region14: #{tpu_custom_call.1} parent=1 // pred_check
      _
    $region15: #{tpu_custom_call.1} parent=1 // pred_check_branch
      %42 = sbr.rel (0) target = $region17
    $region16: #{tpu_custom_call.1} parent=1 // pred_region
      %43 = dma.done [#allocation3], 256
    $region17: #{tpu_custom_call.1} parent=1 // pred_fallthru
      _
    // Predicated region
    $region18: #{tpu_custom_call.1} parent=1 // pred_check
      _
    $region19: #{tpu_custom_call.1} parent=1 // pred_check_branch
      %45 = sbr.rel (0) target = $region21
    $region20: #{tpu_custom_call.1} parent=1 // pred_region
      %46 = dma.done [#allocation6], 256
    $region21: #{tpu_custom_call.1} parent=1 // pred_fallthru
      _
    // Predicated region
    $region22: #{tpu_custom_call.1} parent=1 // pred_check
      _
    $region23: #{tpu_custom_call.1} parent=1 // pred_check_branch
      %48 = sbr.rel (0) target = $region25
    $region24: #{tpu_custom_call.1} parent=1 // pred_region
      %49 = dma.done [#allocation6], 256
    $region25: #{tpu_custom_call.1} parent=1 // pred_fallthru
      _
    %v50 = vld [vmem:[#allocation2] sm:$0xff]
    %v51 = vld [vmem:[#allocation2 + $0x8] sm:$0xff]
    %v52 = vld [vmem:[#allocation5] sm:$0xff]
    %v53 = vld [vmem:[#allocation5 + $0x8] sm:$0xff]
    %v54 = vadd.f32 %v50, %v52
    %v55 = vadd.f32 %v51, %v53
    %v56 = vld [vmem:[#allocation7] sm:$0xff]
    %v57 = vld [vmem:[#allocation7 + $0x8] sm:$0xff]
    %v58 = vadd.f32 %v54, %v56
    %v59 = vadd.f32 %v55, %v57
    %60 = vst [vmem:[#allocation8] sm:$0xff] %v58
    %61 = vst [vmem:[#allocation8 + $0x8] sm:$0xff] %v59
    // Predicated region
    $region26: #{tpu_custom_call.1} parent=1 // pred_check
      _
    $region27: #{tpu_custom_call.1} parent=1 // pred_check_branch
      %63 = sbr.rel (0) target = $region29
    $region28: #{tpu_custom_call.1} parent=1 // pred_region
      %s65 = ssub.s32 256, 256
      %66 = vsyncadd [#allocation4], %s65
      %s68 = sshll.u32 [#allocation8], 4
      %s69 = int_to_ptr.vmem [resolvable:$true] %s68
      %71 = dma.vmem_to_hbm [thread:$0]  %s69, 256, %s3, [#allocation4]
    $region29: #{tpu_custom_call.1} parent=1 // pred_fallthru
      _
    // Predicated region
    $region30: #{tpu_custom_call.1} parent=1 // pred_check
      _
    $region31: #{tpu_custom_call.1} parent=1 // pred_check_branch
      %73 = sbr.rel (0) target = $region33
    $region32: #{tpu_custom_call.1} parent=1 // pred_region
      %74 = dma.done [#allocation4], 256
    $region33: #{tpu_custom_call.1} parent=1 // pred_fallthru
      _
    %75 = vsyncpa [#allocation3], 1
    %76 = vsyncpa [#allocation6], 1
    %77 = vsyncpa [#allocation4], 1

</llo_original>
